<compile_context>
chip_gen: v7x
topology: tpu7x:2x2x1
jax: 0.10.0
libtpu: 0.0.40
codegen_flags: <defaults>
</compile_context>

<pallas_src>
import functools
import math

import jax
import jax.numpy as jnp
from jax.experimental import pallas as pl
from jax.experimental.pallas import tpu as pltpu


def make_positional_encoding(max_len: int, d_model: int) -> jnp.ndarray:
    """Deterministically build pe of shape (max_len, 1, d_model), float32."""
    position = jnp.arange(0, max_len, dtype=jnp.float32)[:, None]             # (L, 1)
    div_term = jnp.exp(
        jnp.arange(0, d_model, 2, dtype=jnp.float32) * (-math.log(10000.0) / d_model)
    )                                                                          # (D/2,)
    angles = position * div_term                                               # (L, D/2)
    pe = jnp.zeros((max_len, d_model), dtype=jnp.float32)
    pe = pe.at[:, 0::2].set(jnp.sin(angles))
    pe = pe.at[:, 1::2].set(jnp.cos(angles))
    return pe[:, None, :]                                                      # (L, 1, D)


def _pos_enc_flat_kernel(x_ref, pe_ref, o_ref, *, batch: int):
    # x_ref/o_ref: (ts, B*D) tiles; pe_ref: (ts, D) tile already in x.dtype.
    pe = pe_ref[...]
    if batch > 1:
        # Lane-aligned replication (D % 128 == 0 on this path): cheap copies.
        pe = jnp.concatenate([pe] * batch, axis=-1)
    o_ref[...] = x_ref[...] + pe


def _pos_enc_bcast_kernel(x_ref, pe_ref, o_ref):
    # x_ref: (ts, B, D); pe_ref: (ts, 1, D) -> sublane broadcast over batch.
    o_ref[...] = x_ref[...] + pe_ref[...]


def _choose_seq_tile(S: int, B: int, D: int, itemsize: int,
                     vmem_budget_bytes: int = 24 << 20) -> int:
    """Largest seq tile whose double-buffered blocks fit the VMEM budget."""
    # Per grid step (double-buffered): x block + out block + pe block.
    row_bytes = 2 * (2 * B + 1) * D * itemsize
    budget_rows = max(8, int(vmem_budget_bytes // max(row_bytes, 1)))
    budget_rows = max(8, (budget_rows // 8) * 8)          # sublane-friendly

    if S <= 8:
        return S                                          # single full-extent block

    ts = min(max(8, (S // 8) * 8), budget_rows)

    # Prefer >= 2 grid steps so both v7x TensorCores get sharded work.
    if ts >= S and S >= 16:
        ts = max(8, (((S + 1) // 2) // 8) * 8)

    # Prefer a tile that divides S (avoids a masked trailing step), without
    # shrinking below half the bandwidth-optimal size.
    if S % ts != 0:
        cand = ts
        while cand >= max(8, ts // 2):
            if S % cand == 0:
                ts = cand
                break
            cand -= 8
    return max(1, ts)


def positional_encoding_forward(x: jnp.ndarray, pe: jnp.ndarray, *,
                                ts: int | None = None,
                                alias_x_to_output: bool = False) -> jnp.ndarray:
    """x: (S, B, D); pe: (max_len, 1, D). Returns x + pe[:S] (broadcast over B)."""
    S, B, D = x.shape
    assert pe.shape[0] >= S and pe.shape[1] == 1 and pe.shape[2] == D

    # Parameter prep (glue): slice to the live rows and pre-cast to x.dtype so
    # the kernel DMAs the minimum pe bytes and does no VPU casts.
    pe_s = pe[:S].astype(x.dtype)                          # (S, 1, D)

    itemsize = jnp.dtype(x.dtype).itemsize
    if ts is None:
        ts = _choose_seq_tile(S, B, D, itemsize)
    ts = max(1, min(ts, S))
    grid = (pl.cdiv(S, ts),)

    # Scoped-VMEM limit sized to the live double-buffered blocks (+ headroom),
    # capped so it is always safe on v7x's 64 MiB physical VMEM.
    block_bytes = ts * (2 * B + 1) * D * itemsize
    vmem_limit = int(min(max(2 * block_bytes + (8 << 20), 16 << 20), 48 << 20))
    params = pltpu.CompilerParams(
        dimension_semantics=("parallel",),
        vmem_limit_bytes=vmem_limit,
    )
    io_alias = ({0: 0} if alias_x_to_output else {})

    if D % 128 == 0:
        # Fast path: (S, B*D) view -> dense sublanes (ts) and lanes (B*D).
        x2 = x.reshape(S, B * D)                           # contiguous: free view
        pe2 = pe_s.reshape(S, D)
        out2 = pl.pallas_call(
            functools.partial(_pos_enc_flat_kernel, batch=B),
            out_shape=jax.ShapeDtypeStruct((S, B * D), x.dtype),
            grid_spec=pl.GridSpec(
                grid=grid,
                in_specs=[
                    pl.BlockSpec((ts, B * D), lambda i: (i, 0)),
                    pl.BlockSpec((ts, D), lambda i: (i, 0)),
                ],
                out_specs=pl.BlockSpec((ts, B * D), lambda i: (i, 0)),
            ),
            compiler_params=params,
            input_output_aliases=io_alias,
        )(x2, pe2)
        return out2.reshape(S, B, D)

    # General fallback: 3-D blocks, sublane broadcast of pe over the batch.
    return pl.pallas_call(
        _pos_enc_bcast_kernel,
        out_shape=jax.ShapeDtypeStruct((S, B, D), x.dtype),
        grid_spec=pl.GridSpec(
            grid=grid,
            in_specs=[
                pl.BlockSpec((ts, B, D), lambda i: (i, 0, 0)),
                pl.BlockSpec((ts, 1, D), lambda i: (i, 0, 0)),
            ],
            out_specs=pl.BlockSpec((ts, B, D), lambda i: (i, 0, 0)),
        ),
        compiler_params=params,
        input_output_aliases=io_alias,
    )(x, pe_s)


if __name__ == "__main__":
    # Small shapes consistent with the module's (seq, batch, d_model) forward;
    # d_model=512 matches the module, max_len kept small for the test.
    seq_len, batch, d_model, max_len = 16, 2, 512, 64

    key = jax.random.PRNGKey(0)
    x = jax.random.normal(key, (seq_len, batch, d_model), dtype=jnp.float32)
    pe = make_positional_encoding(max_len, d_model)        # (max_len, 1, D)

    out = positional_encoding_forward(x, pe)               # flat fast path, 2 steps
    out = jax.block_until_ready(out)

    ref = x + pe[:seq_len, :, :].astype(x.dtype)
    assert out.shape == x.shape
    assert jnp.allclose(out, ref, atol=1e-6), "mismatch vs reference (flat path)"

    # Also exercise the general fallback path (d_model not a multiple of 128).
    d_small = 96
    x2 = jax.random.normal(jax.random.PRNGKey(0), (seq_len, batch, d_small),
                           dtype=jnp.float32)
    pe2 = make_positional_encoding(max_len, d_small)
    out2 = jax.block_until_ready(positional_encoding_forward(x2, pe2))
    ref2 = x2 + pe2[:seq_len, :, :].astype(x2.dtype)
    assert jnp.allclose(out2, ref2, atol=1e-6), "mismatch vs reference (bcast path)"

    print("KERNEL_OK")
</pallas_src>

<mosaic_0001>
module attributes {stable_mosaic.version = 11 : i64} {
  func.func @_pos_enc_flat_kernel(%arg0: i32, %arg1: memref<8x1024xf32, #tpu.memory_space<vmem>>, %arg2: memref<8x512xf32, #tpu.memory_space<vmem>>, %arg3: memref<8x1024xf32, #tpu.memory_space<vmem>>) attributes {dimension_semantics = [#tpu.dimension_semantics<parallel>], iteration_bounds = array<i64: 2>, scalar_prefetch = 0 : i64, scratch_operands = 0 : i64, tpu.core_type = #tpu.core_type<tc>, window_params = [{transform_indices = @transform_0, window_bounds = array<i64: 8, 1024>}, {transform_indices = @transform_1, window_bounds = array<i64: 8, 512>}, {transform_indices = @transform_2, window_bounds = array<i64: 8, 1024>}]} {
    %c0 = arith.constant 0 : index
    %c0_0 = arith.constant 0 : index
    %0 = vector.load %arg2[%c0, %c0_0] : memref<8x512xf32, #tpu.memory_space<vmem>>, vector<8x512xf32>
    %1 = tpu.concatenate %0, %0 in 1 : vector<8x512xf32>, vector<8x512xf32> -> vector<8x1024xf32>
    %c0_1 = arith.constant 0 : index
    %c0_2 = arith.constant 0 : index
    %2 = vector.load %arg1[%c0_1, %c0_2] : memref<8x1024xf32, #tpu.memory_space<vmem>>, vector<8x1024xf32>
    %3 = arith.addf %2, %1 : vector<8x1024xf32>
    %c0_3 = arith.constant 0 : index
    %c0_4 = arith.constant 0 : index
    %4 = vector.load %arg3[%c0_3, %c0_4] : memref<8x1024xf32, #tpu.memory_space<vmem>>, vector<8x1024xf32>
    tpu.vector_store %arg3[%c0_3, %c0_4], %3 {strides = array<i32>} : memref<8x1024xf32, #tpu.memory_space<vmem>>, vector<8x1024xf32>,
    return
  }
  func.func @transform_0(%arg0: i32) -> (i32, i32) {
    %c0_i32 = arith.constant 0 : i32
    %c0_i32_0 = arith.constant 0 : i32
    return %arg0, %c0_i32 : i32, i32
  }
  func.func @transform_1(%arg0: i32) -> (i32, i32) {
    %c0_i32 = arith.constant 0 : i32
    %c0_i32_0 = arith.constant 0 : i32
    return %arg0, %c0_i32 : i32, i32
  }
  func.func @transform_2(%arg0: i32) -> (i32, i32) {
    %c0_i32 = arith.constant 0 : i32
    %c0_i32_0 = arith.constant 0 : i32
    return %arg0, %c0_i32 : i32, i32
  }
}

</mosaic_0001>

<llo_original>
// kernel: tpu_custom_call.1
$region0: #{tpu_custom_call.1}
  #allocation0 [shape = 'u32[]', space=smem, size = 0x4, offset = 0x4, fixed_abs, tag = 'smem constant byte address 0x4 - core index']
  #allocation1 [shape = 'u32[144,128]{1,0:T(1,128)}', space=vmem, size = 0x12000, scoped, tag = 'internal scratch']
  %s0 = inlined_call_operand.hbm [shape: f32[16,1024], index: 0, kind: input, shape index: {}]
  %s1 = inlined_call_operand.hbm [shape: f32[16,512], index: 1, kind: input, shape index: {}]
  %s2 = inlined_call_operand.hbm [shape: f32[16,1024], index: 2, kind: output, shape index: {}]
  %s3 = sld [smem:[#allocation0]]
  $region49: #{tpu_custom_call.1} parent=0
    _
  %s5 = ssub.s32 1, %s3
  %s6 = scalar_select 0, %s5, %s3
  $region1: #{tpu_custom_call.1} parent=0
    #allocation2 [shape = 'u8[65536]{0}', space=vmem, size = 0x10000, scoped, tag = 'input window, operand 0']
    #allocation3 [shape = 's32[2]{0}', space=sflag, size = 0x8, scoped, tag = 'scoped memory for tpu_custom_call.1']
    #allocation4 [shape = 's32[2]{0}', space=sflag, size = 0x8, scoped, tag = 'scoped memory for tpu_custom_call.1']
    #allocation5 [shape = 'u8[32768]{0}', space=vmem, size = 0x8000, scoped, tag = 'input window, operand 1']
    #allocation6 [shape = 's32[2]{0}', space=sflag, size = 0x8, scoped, tag = 'scoped memory for tpu_custom_call.1']
    #allocation7 [shape = 'u8[65536]{0}', space=vmem, size = 0x10000, scoped, tag = 'output window, operand 0']
    %7 = vsyncpa [#allocation3], 0
    %s8 = scalar_lea.sflag [#allocation3], 1
    %9 = vsyncpa %s8, 0
    %10 = vsyncpa [#allocation6], 0
    %s11 = scalar_lea.sflag [#allocation6], 1
    %12 = vsyncpa %s11, 0
    %13 = vsyncpa [#allocation4], 0
    %s14 = scalar_lea.sflag [#allocation4], 1
    %15 = vsyncpa %s14, 0
    loop: start=0, step=1, limit=4
    $region2: #{tpu_custom_call.1} parent=1 // loop_pre_header
      _
    $region3: #{tpu_custom_call.1} parent=1 // loop_header
      %s17 = sphi 0, %s21
      %p18 = scmp.ge.s32.totalorder %s17, 4
      %s27 = sphi 0, %s29
      %s30 = sphi 0, %s27
      %s31 = sphi 0, %s30
      %s47 = sphi 0, %s31
      %s53 = sphi 0, %s55
      %s56 = sphi 0, %s53
      %s57 = sphi 0, %s56
      %s73 = sphi 0, %s57
      %s79 = sphi 0, %s81
      %s82 = sphi 0, %s79
      %s83 = sphi 0, %s82
      %s99 = sphi 0, %s83
    $region4: #{tpu_custom_call.1} parent=1 // loop_header_branch
      %20 = sbr.rel (%p18) target = $region8
    $region5: #{tpu_custom_call.1} parent=1 // loop_body
      %s22 = ssub.s32 %s17, 1
      %s23 = ssub.s32 %s17, 2
      %s24 = sadd.s32 %s17, 1
      %s25 = ssub.s32 %s17, %s24
      %p26 = scmp.eq.s32.totalorder %s25, 0
      %s28 = sadd.s32 %s27, 1
      %s29 = scalar_select %p26, %s27, %s28
      %p32 = pneg %p26
      %p33 = scmp.eq.s32.totalorder %s17, 1
      %p34 = por %p32, %p33
      %p35 = scmp.ne.s32.totalorder %s27, %s30
      %p36 = scmp.eq.s32.totalorder %s17, 0
      %p37 = por %p35, %p36
      %p38 = scmp.ne.s32.totalorder %s27, %s30
      %p39 = scmp.eq.s32.totalorder %s22, 1
      %p40 = por %p38, %p39
      %p41 = scmp.ne.s32.totalorder %s30, %s31
      %p42 = scmp.eq.s32.totalorder %s22, 0
      %p43 = por %p41, %p42
      %p44 = scmp.ne.s32.totalorder %s30, %s31
      %p45 = scmp.eq.s32.totalorder %s23, 1
      %p46 = por %p44, %p45
      %p48 = scmp.ne.s32.totalorder %s31, %s47
      %p49 = scmp.eq.s32.totalorder %s23, 0
      %p50 = por %p48, %p49
      %s51 = ssub.s32 %s17, %s24
      %p52 = scmp.eq.s32.totalorder %s51, 0
      %s54 = sadd.s32 %s53, 1
      %s55 = scalar_select %p52, %s53, %s54
      %p58 = pneg %p52
      %p59 = scmp.eq.s32.totalorder %s17, 1
      %p60 = por %p58, %p59
      %p61 = scmp.ne.s32.totalorder %s53, %s56
      %p62 = scmp.eq.s32.totalorder %s17, 0
      %p63 = por %p61, %p62
      %p64 = scmp.ne.s32.totalorder %s53, %s56
      %p65 = scmp.eq.s32.totalorder %s22, 1
      %p66 = por %p64, %p65
      %p67 = scmp.ne.s32.totalorder %s56, %s57
      %p68 = scmp.eq.s32.totalorder %s22, 0
      %p69 = por %p67, %p68
      %p70 = scmp.ne.s32.totalorder %s56, %s57
      %p71 = scmp.eq.s32.totalorder %s23, 1
      %p72 = por %p70, %p71
      %p74 = scmp.ne.s32.totalorder %s57, %s73
      %p75 = scmp.eq.s32.totalorder %s23, 0
      %p76 = por %p74, %p75
      %s77 = ssub.s32 %s17, %s24
      %p78 = scmp.eq.s32.totalorder %s77, 0
      %s80 = sadd.s32 %s79, 1
      %s81 = scalar_select %p78, %s79, %s80
      %p84 = pneg %p78
      %p85 = scmp.eq.s32.totalorder %s17, 1
      %p86 = por %p84, %p85
      %p87 = scmp.ne.s32.totalorder %s79, %s82
      %p88 = scmp.eq.s32.totalorder %s17, 0
      %p89 = por %p87, %p88
      %p90 = scmp.ne.s32.totalorder %s79, %s82
      %p91 = scmp.eq.s32.totalorder %s22, 1
      %p92 = por %p90, %p91
      %p93 = scmp.ne.s32.totalorder %s82, %s83
      %p94 = scmp.eq.s32.totalorder %s22, 0
      %p95 = por %p93, %p94
      %p96 = scmp.ne.s32.totalorder %s82, %s83
      %p97 = scmp.eq.s32.totalorder %s23, 1
      %p98 = por %p96, %p97
      %p100 = scmp.ne.s32.totalorder %s83, %s99
      %p101 = scmp.eq.s32.totalorder %s23, 0
      %p102 = por %p100, %p101
      %p103 = scmp.le.s32.totalorder 1, %s17
      %p104 = scmp.lt.s32.totalorder %s17, 3
      %p105 = pnand %p103, %p104
      %p106 = pneg %p105
      // Predicated region
      $region9: #{tpu_custom_call.1} parent=5 // pred_check
        _
      $region10: #{tpu_custom_call.1} parent=5 // pred_check_branch
        %108 = sbr.rel (%p105) target = $region12
      $region11: #{tpu_custom_call.1} parent=5 // pred_region
        %s109 = ssub.s32 %s17, 1
      $region12: #{tpu_custom_call.1} parent=5 // pred_fallthru
        _
      %p110 = scmp.lt.s32.totalorder %s17, 2
      // Predicated region
      $region13: #{tpu_custom_call.1} parent=5 // pred_check
        %p111 = pneg %p110
      $region14: #{tpu_custom_call.1} parent=5 // pred_check_branch
        %113 = sbr.rel (%p111) target = $region16
      $region15: #{tpu_custom_call.1} parent=5 // pred_region
        // Predicated region
        $region17: #{tpu_custom_call.1} parent=15 // pred_check
          %p114 = pneg %p37
        $region18: #{tpu_custom_call.1} parent=15 // pred_check_branch
          %116 = sbr.rel (%p114) target = $region20
        $region19: #{tpu_custom_call.1} parent=15 // pred_region
          %s117 = sand.u32 %s27, 1
          %s118 = scalar_lea.sflag [#allocation3], %s117
          %s119 = sand.u32 %s27, 1
          %s120 = smul.addr %s119, 64
          %s121 = scalar_lea.vmem [#allocation2], %s120
          %s123 = ssub.s32 1024, 1024
          %124 = vsyncadd %s118, %s123
          %s125 = smul.addr %s17, 8
          %s126 = smul.addr %s125, 128
          %s127 = scalar_lea.hbm %s0, %s126
          %s129 = sshll.u32 %s121, 4
          %s130 = int_to_ptr.vmem [resolvable:$true] %s129
          %132 = dma.hbm_to_vmem [thread:$0]  %s127, 1024, %s130, %s118
        $region20: #{tpu_custom_call.1} parent=15 // pred_fallthru
          _
        // Predicated region
        $region21: #{tpu_custom_call.1} parent=15 // pred_check
          %p133 = pneg %p63
        $region22: #{tpu_custom_call.1} parent=15 // pred_check_branch
          %135 = sbr.rel (%p133) target = $region24
        $region23: #{tpu_custom_call.1} parent=15 // pred_region
          %s136 = sand.u32 %s53, 1
          %s137 = scalar_lea.sflag [#allocation6], %s136
          %s138 = sand.u32 %s53, 1
          %s139 = smul.addr %s138, 32
          %s140 = scalar_lea.vmem [#allocation5], %s139
          %s142 = ssub.s32 512, 512
          %143 = vsyncadd %s137, %s142
          %s144 = smul.addr %s17, 4
          %s145 = smul.addr %s144, 128
          %s146 = scalar_lea.hbm %s1, %s145
          %s148 = sshll.u32 %s140, 4
          %s149 = int_to_ptr.vmem [resolvable:$true] %s148
          %151 = dma.hbm_to_vmem [thread:$0]  %s146, 512, %s149, %s137
        $region24: #{tpu_custom_call.1} parent=15 // pred_fallthru
          _
      $region16: #{tpu_custom_call.1} parent=5 // pred_fallthru
        _
      %p152 = scmp.le.s32.totalorder 1, %s17
      %p153 = scmp.lt.s32.totalorder %s17, 3
      %p154 = pnand %p152, %p153
      %p155 = pneg %p154
      // Predicated region
      $region25: #{tpu_custom_call.1} parent=5 // pred_check
        _
      $region26: #{tpu_custom_call.1} parent=5 // pred_check_branch
        %157 = sbr.rel (%p154) target = $region28
      $region27: #{tpu_custom_call.1} parent=5 // pred_region
        %s158 = ssub.s32 %s17, 1
        %s159 = sand.u32 %s30, 1
        %s160 = scalar_lea.sflag [#allocation3], %s159
        %s161 = sand.u32 %s30, 1
        %s162 = smul.addr %s161, 64
        %s163 = scalar_lea.vmem [#allocation2], %s162
        // Predicated region
        $region29: #{tpu_custom_call.1} parent=27 // pred_check
          %p164 = pneg %p43
        $region30: #{tpu_custom_call.1} parent=27 // pred_check_branch
          %166 = sbr.rel (%p164) target = $region32
        $region31: #{tpu_custom_call.1} parent=27 // pred_region
          %167 = dma.done %s160, 1024
        $region32: #{tpu_custom_call.1} parent=27 // pred_fallthru
          _
        %s168 = sand.u32 %s56, 1
        %s169 = scalar_lea.sflag [#allocation6], %s168
        %s170 = sand.u32 %s56, 1
        %s171 = smul.addr %s170, 32
        %s172 = scalar_lea.vmem [#allocation5], %s171
        // Predicated region
        $region33: #{tpu_custom_call.1} parent=27 // pred_check
          %p173 = pneg %p69
        $region34: #{tpu_custom_call.1} parent=27 // pred_check_branch
          %175 = sbr.rel (%p173) target = $region36
        $region35: #{tpu_custom_call.1} parent=27 // pred_region
          %176 = dma.done %s169, 512
        $region36: #{tpu_custom_call.1} parent=27 // pred_fallthru
          _
        %s177 = sand.u32 %s30, 1
        %s178 = scalar_lea.sflag [#allocation3], %s177
        %s179 = sand.u32 %s30, 1
        %s180 = smul.addr %s179, 64
        %s181 = scalar_lea.vmem [#allocation2], %s180
        %p182 = pneg %p43
        %p183 = pneg %p40
        %s184 = sand.u32 %s56, 1
        %s185 = scalar_lea.sflag [#allocation6], %s184
        %s186 = sand.u32 %s56, 1
        %s187 = smul.addr %s186, 32
        %s188 = scalar_lea.vmem [#allocation5], %s187
        %p189 = pneg %p69
        %p190 = pneg %p66
        %p191 = pneg %p95
        %p192 = pneg %p92
        %s193 = sand.u32 %s82, 1
        %s194 = scalar_lea.sflag [#allocation4], %s193
        %s195 = sand.u32 %s82, 1
        %s196 = smul.addr %s195, 64
        %s197 = scalar_lea.vmem [#allocation7], %s196
        %v198 = vld [vmem:[%s172] sm:$0xff]
        %v199 = vld [vmem:[%s172 + $0x8] sm:$0xff]
        %v200 = vld [vmem:[%s172 + $0x10] sm:$0xff]
        %v201 = vld [vmem:[%s172 + $0x18] sm:$0xff]
        %v202 = vld [vmem:[%s163] sm:$0xff]
        %v203 = vld [vmem:[%s163 + $0x8] sm:$0xff]
        %v204 = vld [vmem:[%s163 + $0x10] sm:$0xff]
        %v205 = vld [vmem:[%s163 + $0x18] sm:$0xff]
        %v206 = vld [vmem:[%s163 + $0x20] sm:$0xff]
        %v207 = vld [vmem:[%s163 + $0x28] sm:$0xff]
        %v208 = vld [vmem:[%s163 + $0x30] sm:$0xff]
        %v209 = vld [vmem:[%s163 + $0x38] sm:$0xff]
        %v210 = vadd.f32 %v202, %v198
        %v211 = vadd.f32 %v203, %v199
        %v212 = vadd.f32 %v204, %v200
        %v213 = vadd.f32 %v205, %v201
        %v214 = vadd.f32 %v206, %v198
        %v215 = vadd.f32 %v207, %v199
        %v216 = vadd.f32 %v208, %v200
        %v217 = vadd.f32 %v209, %v201
        %218 = vst [vmem:[%s197] sm:$0xff] %v210
        %219 = vst [vmem:[%s197 + $0x8] sm:$0xff] %v211
        %220 = vst [vmem:[%s197 + $0x10] sm:$0xff] %v212
        %221 = vst [vmem:[%s197 + $0x18] sm:$0xff] %v213
        %222 = vst [vmem:[%s197 + $0x20] sm:$0xff] %v214
        %223 = vst [vmem:[%s197 + $0x28] sm:$0xff] %v215
        %224 = vst [vmem:[%s197 + $0x30] sm:$0xff] %v216
        %225 = vst [vmem:[%s197 + $0x38] sm:$0xff] %v217
        %s226 = sand.u32 %s82, 1
        %s227 = scalar_lea.sflag [#allocation4], %s226
        %s228 = sand.u32 %s82, 1
        %s229 = smul.addr %s228, 64
        %s230 = scalar_lea.vmem [#allocation7], %s229
        // Predicated region
        $region37: #{tpu_custom_call.1} parent=27 // pred_check
          %p231 = pneg %p92
        $region38: #{tpu_custom_call.1} parent=27 // pred_check_branch
          %233 = sbr.rel (%p231) target = $region40
        $region39: #{tpu_custom_call.1} parent=27 // pred_region
          %s235 = ssub.s32 1024, 1024
          %236 = vsyncadd %s227, %s235
          %s237 = smul.addr %s22, 8
          %s238 = smul.addr %s237, 128
          %s239 = scalar_lea.hbm %s2, %s238
          %s241 = sshll.u32 %s230, 4
          %s242 = int_to_ptr.vmem [resolvable:$true] %s241
          %244 = dma.vmem_to_hbm [thread:$0]  %s242, 1024, %s239, %s227
        $region40: #{tpu_custom_call.1} parent=27 // pred_fallthru
          _
      $region28: #{tpu_custom_call.1} parent=5 // pred_fallthru
        _
      %p245 = scmp.le.s32.totalorder 2, %s17
      // Predicated region
      $region41: #{tpu_custom_call.1} parent=5 // pred_check
        %p246 = pneg %p245
      $region42: #{tpu_custom_call.1} parent=5 // pred_check_branch
        %248 = sbr.rel (%p246) target = $region44
      $region43: #{tpu_custom_call.1} parent=5 // pred_region
        %s249 = ssub.s32 %s17, 2
        // Predicated region
        $region45: #{tpu_custom_call.1} parent=43 // pred_check
          %p250 = pneg %p98
        $region46: #{tpu_custom_call.1} parent=43 // pred_check_branch
          %252 = sbr.rel (%p250) target = $region48
        $region47: #{tpu_custom_call.1} parent=43 // pred_region
          %s253 = sand.u32 %s83, 1
          %s254 = scalar_lea.sflag [#allocation4], %s253
          %s255 = sand.u32 %s83, 1
          %s256 = smul.addr %s255, 64
          %s257 = scalar_lea.vmem [#allocation7], %s256
          %258 = dma.done %s254, 1024
        $region48: #{tpu_custom_call.1} parent=43 // pred_fallthru
          _
      $region44: #{tpu_custom_call.1} parent=5 // pred_fallthru
        _
    $region6: #{tpu_custom_call.1} parent=1 // loop_footer
      %s21 = sadd.s32 1, %s17
    $region7: #{tpu_custom_call.1} parent=1 // loop_footer_branch
      %16 = sbr.rel target = $region3
    $region8: #{tpu_custom_call.1} parent=1 // loop_exit
      _
    %259 = vsyncpa [#allocation3], 1
    %s260 = scalar_lea.sflag [#allocation3], 1
    %261 = vsyncpa %s260, 1
    %262 = vsyncpa [#allocation6], 1
    %s263 = scalar_lea.sflag [#allocation6], 1
    %264 = vsyncpa %s263, 1
    %265 = vsyncpa [#allocation4], 1
    %s266 = scalar_lea.sflag [#allocation4], 1
    %267 = vsyncpa %s266, 1

</llo_original>
